<compile_context>
chip_gen: v6e
topology: v6e:2x2x1
jax: 0.10.0
libtpu: 0.0.40
codegen_flags: <defaults>
</compile_context>

<pallas_src>
import functools

import jax
import jax.numpy as jnp
from jax.experimental import pallas as pl
from jax.experimental.pallas import tpu as pltpu

THRESH = 0.5
EPS = 1e-5


def _vmem_budget():
    """(vmem_limit_bytes, per-block byte budget), gated per TPU generation."""
    try:
        cap = int(pltpu.get_tpu_info().vmem_capacity_bytes)
    except Exception:
        cap = 64 * 1024 * 1024  # conservative: v7x per-TensorCore VMEM
    vmem_limit = min(cap * 3 // 4, 96 * 1024 * 1024)      # 48 MiB v7x, 96 MiB v5e/v6e
    block_bytes = min(8 * 1024 * 1024, vmem_limit // 8)   # 2x(in+out) stays well under
    return int(vmem_limit), int(block_bytes)


def _round_up(v, m):
    return -(-v // m) * m


def _largest_divisor_multiple(total, quantum, cap):
    """Largest multiple of `quantum` dividing `total`, <= cap (>= quantum)."""
    best = quantum
    m = quantum
    limit = min(total, max(cap, quantum))
    while m <= limit:
        if total % m == 0:
            best = m
        m += quantum
    return best


def _choose_tiles(nc_p, hw_p, block_bytes):
    """Byte-budgeted (R, TL): TL multiple of 128 lanes, R multiple of 8 rows."""
    elems = max(block_bytes // 4, 8 * 128)  # budget in f32 elements (kernel upcasts)
    tl = _largest_divisor_multiple(hw_p, 128, (elems // 8) // 128 * 128)
    r = _largest_divisor_multiple(nc_p, 8, (elems // tl) // 8 * 8)
    return r, tl


# ---------------------------------------------------------------------------
# Kernels
# ---------------------------------------------------------------------------
def _stats_kernel(x_ref, sum_ref, sq_ref):
    """Per-row partial sum / sum-of-squares; accumulator resident across j."""

    @pl.when(pl.program_id(1) == 0)
    def _():
        sum_ref[...] = jnp.zeros_like(sum_ref)
        sq_ref[...] = jnp.zeros_like(sq_ref)

    x = x_ref[...].astype(jnp.float32)                      # (R, TL) f32 accum
    sum_ref[...] += jnp.sum(x, axis=1, keepdims=True)       # (R, 1)
    sq_ref[...] += jnp.sum(x * x, axis=1, keepdims=True)    # (R, 1)


def _apply_kernel(x_ref, scale_ref, shift_ref, o_ref):
    """y = x * scale + shift  (scale/shift are per-row (R, 1))."""
    x = x_ref[...].astype(jnp.float32)                      # (R, TL)
    o_ref[...] = (x * scale_ref[...] + shift_ref[...]).astype(o_ref.dtype)


def _fused_kernel(x_ref, w_ref, b_ref, o_ref, *, count, eps):
    """Single-pass, VMEM-resident: stats + normalize in one shot."""
    x = x_ref[...].astype(jnp.float32)                      # (N, C, HWp)
    s = jnp.sum(jnp.sum(x, axis=2, keepdims=True), axis=0, keepdims=True)
    sq = jnp.sum(jnp.sum(x * x, axis=2, keepdims=True), axis=0, keepdims=True)
    inv_count = 1.0 / count
    mean = s * inv_count                                    # (1, C, 1)
    var = jnp.maximum(sq * inv_count - mean * mean, 0.0)    # biased variance
    inv_std = jax.lax.rsqrt(var + eps)
    scale = w_ref[...] * inv_std                            # (1, C, 1)
    shift = b_ref[...] - mean * scale
    o_ref[...] = (x * scale + shift).astype(o_ref.dtype)


# ---------------------------------------------------------------------------
# Wrapper
# ---------------------------------------------------------------------------
def batch_norm_2d_forward(x_nchw, weight, bias, eps=EPS, force_two_pass=False):
    """x_nchw: (N, C, H, W); weight, bias: (C,)."""
    n, c, h, w = x_nchw.shape
    hw = h * w
    nc = n * c
    itemsize = jnp.dtype(x_nchw.dtype).itemsize
    vmem_limit, block_bytes = _vmem_budget()

    hw_p = max(_round_up(hw, 128), 128)
    nc_p = max(_round_up(nc, 8), 8)

    # ---- Single-pass VMEM-resident fast path (1 HBM read + 1 HBM write) ----
    fused_live = n * c * hw_p * (2 * itemsize + 8)  # in + out blocks + ~2 f32 temps
    if (not force_two_pass) and fused_live <= vmem_limit // 2:
        x3d = x_nchw.reshape(n, c, hw)
        if hw_p != hw:
            x3d = jnp.pad(x3d, ((0, 0), (0, 0), (0, hw_p - hw)))
        kern = functools.partial(_fused_kernel, count=float(n * hw), eps=float(eps))
        out3d = pl.pallas_call(
            kern,
            out_shape=jax.ShapeDtypeStruct((n, c, hw_p), x_nchw.dtype),
            grid=(1,),
            in_specs=[
                pl.BlockSpec((n, c, hw_p), lambda i: (0, 0, 0)),
                pl.BlockSpec((1, c, 1), lambda i: (0, 0, 0)),
                pl.BlockSpec((1, c, 1), lambda i: (0, 0, 0)),
            ],
            out_specs=pl.BlockSpec((n, c, hw_p), lambda i: (0, 0, 0)),
            compiler_params=pltpu.CompilerParams(
                dimension_semantics=("arbitrary",),
                vmem_limit_bytes=vmem_limit,
            ),
        )(
            x3d,
            weight.reshape(1, c, 1).astype(jnp.float32),
            bias.reshape(1, c, 1).astype(jnp.float32),
        )
        return out3d[:, :, :hw].reshape(n, c, h, w)

    # ---- Two-pass tiled path ----
    x2d = x_nchw.reshape(nc, hw)  # free view of NCHW, no transpose
    if (nc_p != nc) or (hw_p != hw):
        x2d = jnp.pad(x2d, ((0, nc_p - nc), (0, hw_p - hw)))

    r, tl = _choose_tiles(nc_p, hw_p, block_bytes)
    grid = (nc_p // r, hw_p // tl)

    # Pass 1: per-row-block partial sums (row axis megacore-parallel).
    sums, sqs = pl.pallas_call(
        _stats_kernel,
        out_shape=(
            jax.ShapeDtypeStruct((nc_p, 1), jnp.float32),
            jax.ShapeDtypeStruct((nc_p, 1), jnp.float32),
        ),
        grid=grid,
        in_specs=[pl.BlockSpec((r, tl), lambda i, j: (i, j))],
        out_specs=(
            pl.BlockSpec((r, 1), lambda i, j: (i, 0)),
            pl.BlockSpec((r, 1), lambda i, j: (i, 0)),
        ),
        compiler_params=pltpu.CompilerParams(
            dimension_semantics=("parallel", "arbitrary"),
            vmem_limit_bytes=vmem_limit,
        ),
    )(x2d)

    # Tiny (n, c)-sized math between passes: fold into per-row scale/shift.
    count = jnp.float32(n * hw)  # original count: padded zeros never bias stats
    sum_c = jnp.sum(sums[:nc, 0].reshape(n, c), axis=0)
    sq_c = jnp.sum(sqs[:nc, 0].reshape(n, c), axis=0)
    mean = sum_c / count
    var = jnp.maximum(sq_c / count - mean * mean, 0.0)      # biased variance
    inv_std = jax.lax.rsqrt(var + eps)
    scale_c = weight.astype(jnp.float32) * inv_std
    shift_c = bias.astype(jnp.float32) - mean * scale_c
    scale_rows = jnp.tile(scale_c, n)                       # (n*c,), row i = a*c + ch
    shift_rows = jnp.tile(shift_c, n)
    if nc_p != nc:
        scale_rows = jnp.pad(scale_rows, (0, nc_p - nc))
        shift_rows = jnp.pad(shift_rows, (0, nc_p - nc))
    scale_rows = scale_rows.reshape(nc_p, 1)
    shift_rows = shift_rows.reshape(nc_p, 1)

    # Pass 2: normalize, fully parallel on both grid axes.
    out2d = pl.pallas_call(
        _apply_kernel,
        out_shape=jax.ShapeDtypeStruct((nc_p, hw_p), x_nchw.dtype),
        grid=grid,
        in_specs=[
            pl.BlockSpec((r, tl), lambda i, j: (i, j)),
            pl.BlockSpec((r, 1), lambda i, j: (i, 0)),
            pl.BlockSpec((r, 1), lambda i, j: (i, 0)),
        ],
        out_specs=pl.BlockSpec((r, tl), lambda i, j: (i, j)),
        compiler_params=pltpu.CompilerParams(
            dimension_semantics=("parallel", "parallel"),
            vmem_limit_bytes=vmem_limit,
        ),
    )(x2d, scale_rows, shift_rows)

    return out2d[:nc, :hw].reshape(n, c, h, w)


def _reference(x_nchw, weight, bias, eps=EPS):
    xf = x_nchw.astype(jnp.float32)
    mean = jnp.mean(xf, axis=(0, 2, 3), keepdims=True)
    var = jnp.mean((xf - mean) ** 2, axis=(0, 2, 3), keepdims=True)
    ww = weight.reshape(1, -1, 1, 1).astype(jnp.float32)
    bb = bias.reshape(1, -1, 1, 1).astype(jnp.float32)
    return ((xf - mean) * jax.lax.rsqrt(var + eps) * ww + bb).astype(x_nchw.dtype)


if __name__ == "__main__":
    key = jax.random.PRNGKey(0)
    N, C, H, W = 2, 4, 16, 16

    x = jax.random.normal(key, (N, C, H, W), dtype=jnp.float32)
    # Deterministic parameter init matching BatchNorm2d1.reset_parameters():
    weight = jnp.full((C,), THRESH, dtype=jnp.float32)
    bias = jnp.zeros((C,), dtype=jnp.float32)

    y_ref = _reference(x, weight, bias)

    # Fused single-pass (VMEM-resident) path.
    y_fused = jax.block_until_ready(batch_norm_2d_forward(x, weight, bias))
    assert jnp.allclose(y_fused, y_ref, atol=1e-4, rtol=1e-4), "fused path mismatch"

    # Two-pass tiled path (taken automatically for large activations).
    y_tiled = jax.block_until_ready(
        batch_norm_2d_forward(x, weight, bias, force_two_pass=True))
    assert jnp.allclose(y_tiled, y_ref, atol=1e-4, rtol=1e-4), "two-pass path mismatch"

    print("KERNEL_OK")
</pallas_src>

<mosaic_0001>
module attributes {stable_mosaic.version = 11 : i64} {
  func.func @_fused_kernel(%arg0: i32, %arg1: memref<2x4x256xf32, #tpu.memory_space<vmem>>, %arg2: memref<1x4x1xf32, #tpu.memory_space<vmem>>, %arg3: memref<1x4x1xf32, #tpu.memory_space<vmem>>, %arg4: memref<2x4x256xf32, #tpu.memory_space<vmem>>) attributes {dimension_semantics = [#tpu.dimension_semantics<arbitrary>], iteration_bounds = array<i64: 1>, scalar_prefetch = 0 : i64, scratch_operands = 0 : i64, tpu.core_type = #tpu.core_type<tc>, window_params = [{pipeline_mode = #tpu.pipeline_mode<synchronous>, transform_indices = @transform_0, window_bounds = array<i64: 2, 4, 256>}, {pipeline_mode = #tpu.pipeline_mode<synchronous>, transform_indices = @transform_1, window_bounds = array<i64: 1, 4, 1>}, {pipeline_mode = #tpu.pipeline_mode<synchronous>, transform_indices = @transform_2, window_bounds = array<i64: 1, 4, 1>}, {pipeline_mode = #tpu.pipeline_mode<synchronous>, transform_indices = @transform_3, window_bounds = array<i64: 2, 4, 256>}]} {
    %c0 = arith.constant 0 : index
    %c0_0 = arith.constant 0 : index
    %c0_1 = arith.constant 0 : index
    %0 = vector.load %arg1[%c0, %c0_0, %c0_1] : memref<2x4x256xf32, #tpu.memory_space<vmem>>, vector<2x4x256xf32>
    %cst = arith.constant dense<0.000000e+00> : vector<2x4xf32>
    %1 = vector.multi_reduction <add>, %0, %cst [2] : vector<2x4x256xf32> to vector<2x4xf32>
    %2 = vector.shape_cast %1 : vector<2x4xf32> to vector<2x4x1xf32>
    %cst_2 = arith.constant dense<0.000000e+00> : vector<4x1xf32>
    %3 = vector.multi_reduction <add>, %2, %cst_2 [0] : vector<2x4x1xf32> to vector<4x1xf32>
    %4 = vector.shape_cast %3 : vector<4x1xf32> to vector<1x4x1xf32>
    %5 = arith.mulf %0, %0 : vector<2x4x256xf32>
    %cst_3 = arith.constant dense<0.000000e+00> : vector<2x4xf32>
    %6 = vector.multi_reduction <add>, %5, %cst_3 [2] : vector<2x4x256xf32> to vector<2x4xf32>
    %7 = vector.shape_cast %6 : vector<2x4xf32> to vector<2x4x1xf32>
    %cst_4 = arith.constant dense<0.000000e+00> : vector<4x1xf32>
    %8 = vector.multi_reduction <add>, %7, %cst_4 [0] : vector<2x4x1xf32> to vector<4x1xf32>
    %9 = vector.shape_cast %8 : vector<4x1xf32> to vector<1x4x1xf32>
    %cst_5 = arith.constant 0.001953125 : f32
    %10 = vector.broadcast %cst_5 : f32 to vector<1x4x1xf32>
    %11 = arith.mulf %4, %10 : vector<1x4x1xf32>
    %cst_6 = arith.constant 0.001953125 : f32
    %12 = vector.broadcast %cst_6 : f32 to vector<1x4x1xf32>
    %13 = arith.mulf %9, %12 : vector<1x4x1xf32>
    %14 = arith.mulf %11, %11 : vector<1x4x1xf32>
    %15 = arith.subf %13, %14 : vector<1x4x1xf32>
    %cst_7 = arith.constant 0.000000e+00 : f32
    %16 = vector.broadcast %cst_7 : f32 to vector<1x4x1xf32>
    %17 = arith.maximumf %15, %16 : vector<1x4x1xf32>
    %cst_8 = arith.constant 9.99999974E-6 : f32
    %18 = vector.broadcast %cst_8 : f32 to vector<1x4x1xf32>
    %19 = arith.addf %17, %18 : vector<1x4x1xf32>
    %20 = math.rsqrt %19 : vector<1x4x1xf32>
    %c0_9 = arith.constant 0 : index
    %c0_10 = arith.constant 0 : index
    %c0_11 = arith.constant 0 : index
    %21 = vector.load %arg2[%c0_9, %c0_10, %c0_11] : memref<1x4x1xf32, #tpu.memory_space<vmem>>, vector<1x4x1xf32>
    %22 = arith.mulf %21, %20 : vector<1x4x1xf32>
    %c0_12 = arith.constant 0 : index
    %c0_13 = arith.constant 0 : index
    %c0_14 = arith.constant 0 : index
    %23 = vector.load %arg3[%c0_12, %c0_13, %c0_14] : memref<1x4x1xf32, #tpu.memory_space<vmem>>, vector<1x4x1xf32>
    %24 = arith.mulf %11, %22 : vector<1x4x1xf32>
    %25 = arith.subf %23, %24 : vector<1x4x1xf32>
    %26 = vector.broadcast %22 : vector<1x4x1xf32> to vector<2x4x256xf32>
    %27 = arith.mulf %0, %26 : vector<2x4x256xf32>
    %28 = vector.broadcast %25 : vector<1x4x1xf32> to vector<2x4x256xf32>
    %29 = arith.addf %27, %28 : vector<2x4x256xf32>
    %c0_15 = arith.constant 0 : index
    %c0_16 = arith.constant 0 : index
    %c0_17 = arith.constant 0 : index
    %30 = vector.load %arg4[%c0_15, %c0_16, %c0_17] : memref<2x4x256xf32, #tpu.memory_space<vmem>>, vector<2x4x256xf32>
    tpu.vector_store %arg4[%c0_15, %c0_16, %c0_17], %29 {strides = array<i32>} : memref<2x4x256xf32, #tpu.memory_space<vmem>>, vector<2x4x256xf32>,
    return
  }
  func.func @transform_0(%arg0: i32) -> (i32, i32, i32) {
    %c0_i32 = arith.constant 0 : i32
    %c0_i32_0 = arith.constant 0 : i32
    %c0_i32_1 = arith.constant 0 : i32
    %c0_i32_2 = arith.constant 0 : i32
    return %c0_i32, %c0_i32_0, %c0_i32_1 : i32, i32, i32
  }
  func.func @transform_1(%arg0: i32) -> (i32, i32, i32) {
    %c0_i32 = arith.constant 0 : i32
    %c0_i32_0 = arith.constant 0 : i32
    %c0_i32_1 = arith.constant 0 : i32
    %c0_i32_2 = arith.constant 0 : i32
    return %c0_i32, %c0_i32_0, %c0_i32_1 : i32, i32, i32
  }
  func.func @transform_2(%arg0: i32) -> (i32, i32, i32) {
    %c0_i32 = arith.constant 0 : i32
    %c0_i32_0 = arith.constant 0 : i32
    %c0_i32_1 = arith.constant 0 : i32
    %c0_i32_2 = arith.constant 0 : i32
    return %c0_i32, %c0_i32_0, %c0_i32_1 : i32, i32, i32
  }
  func.func @transform_3(%arg0: i32) -> (i32, i32, i32) {
    %c0_i32 = arith.constant 0 : i32
    %c0_i32_0 = arith.constant 0 : i32
    %c0_i32_1 = arith.constant 0 : i32
    %c0_i32_2 = arith.constant 0 : i32
    return %c0_i32, %c0_i32_0, %c0_i32_1 : i32, i32, i32
  }
}

</mosaic_0001>

<llo_original>
// kernel: tpu_custom_call.1
$region0: #{tpu_custom_call.1}
  #allocation0 [shape = 'u32[]', space=smem, size = 0x4, offset = 0x4, fixed_abs, tag = 'smem constant byte address 0x4 - core index']
  #allocation1 [shape = 'u32[144,128]{1,0:T(1,128)}', space=vmem, size = 0x12000, scoped, tag = 'internal scratch']
  %s0 = inlined_call_operand.hbm [shape: f32[2,4,256], index: 0, kind: input, shape index: {}]
  %s1 = inlined_call_operand.vmem [shape: f32[1,4,1], index: 1, kind: input, shape index: {}]
  %s2 = inlined_call_operand.vmem [shape: f32[1,4,1], index: 2, kind: input, shape index: {}]
  %s3 = inlined_call_operand.hbm [shape: f32[2,4,256], index: 3, kind: output, shape index: {}]
  %s4 = sld [smem:[#allocation0]]
  $region26: #{tpu_custom_call.1} parent=0
    _
  %s6 = ssub.s32 1, %s4
  %s7 = scalar_select 0, %s6, %s4
  $region1: #{tpu_custom_call.1} parent=0
    #allocation2 [shape = 'u8[8192]{0}', space=vmem, size = 0x2000, scoped, tag = 'input window, operand 0, single buffered']
    #allocation3 [shape = 's32[1]{0}', space=sflag, size = 0x4, scoped, tag = 'scoped memory for tpu_custom_call.1']
    #allocation4 [shape = 's32[1]{0}', space=sflag, size = 0x4, scoped, tag = 'scoped memory for tpu_custom_call.1']
    #allocation5 [shape = 'u8[8192]{0}', space=vmem, size = 0x2000, scoped, tag = 'output window, operand 0, single buffered']
    %8 = vsyncpa [#allocation3], 0
    %9 = vsyncpa [#allocation4], 0
    // Predicated region
    $region2: #{tpu_custom_call.1} parent=1 // pred_check
      _
    $region3: #{tpu_custom_call.1} parent=1 // pred_check_branch
      %11 = sbr.rel (0) target = $region5
    $region4: #{tpu_custom_call.1} parent=1 // pred_region
      %s13 = ssub.s32 256, 256
      %14 = vsyncadd [#allocation3], %s13
      %s15 = sshll.u32 [#allocation2], 4
      %s16 = int_to_ptr.vmem [resolvable:$true] %s15
      %21 = dma.hbm_to_vmem [thread:$0]  %s0, 256, %s16, [#allocation3], 128, 128, 8
    $region5: #{tpu_custom_call.1} parent=1 // pred_fallthru
      _
    // Predicated region
    $region6: #{tpu_custom_call.1} parent=1 // pred_check
      _
    $region7: #{tpu_custom_call.1} parent=1 // pred_check_branch
      %23 = sbr.rel (0) target = $region9
    $region8: #{tpu_custom_call.1} parent=1 // pred_region
      _
    $region9: #{tpu_custom_call.1} parent=1 // pred_fallthru
      _
    // Predicated region
    $region10: #{tpu_custom_call.1} parent=1 // pred_check
      _
    $region11: #{tpu_custom_call.1} parent=1 // pred_check_branch
      %25 = sbr.rel (0) target = $region13
    $region12: #{tpu_custom_call.1} parent=1 // pred_region
      _
    $region13: #{tpu_custom_call.1} parent=1 // pred_fallthru
      _
    // Predicated region
    $region14: #{tpu_custom_call.1} parent=1 // pred_check
      _
    $region15: #{tpu_custom_call.1} parent=1 // pred_check_branch
      %27 = sbr.rel (0) target = $region17
    $region16: #{tpu_custom_call.1} parent=1 // pred_region
      %28 = dma.done [#allocation3], 256
    $region17: #{tpu_custom_call.1} parent=1 // pred_fallthru
      _
    %v29 = vld [vmem:[#allocation2] sm:$0xff]
    %v30 = vld [vmem:[#allocation2 + $0x8] sm:$0xff]
    %v33 = vcombine.high %v29, %v29
    %v34 = vcombine.high %v30, %v30
    %vm37 = vcmask 1043456
    %v38 = vsel %vm37, %v29, 0.0
    %v39 = vsel %vm37, %v33, 0.0
    %v40 = vadd.f32 %v38, %v39
    %41 = vadd.xlane.f32.xlu0 %v40
    %v42 = vpop.xlane.xlu0 %41
    %v43 = vsel %vm37, %v30, 0.0
    %v44 = vsel %vm37, %v34, 0.0
    %v45 = vadd.f32 %v43, %v44
    %46 = vadd.xlane.f32.xlu0 %v45
    %v47 = vpop.xlane.xlu0 %46
    %v48 = vsel %vm37, %v42, 0.0
    %v49 = vsel %vm37, %v47, 0.0
    %v50 = vadd.f32 %v48, %v49
    %v51 = vmul.f32 %v29, %v29
    %v52 = vmul.f32 %v30, %v30
    %v55 = vcombine.high %v51, %v51
    %v56 = vcombine.high %v52, %v52
    %v59 = vsel %vm37, %v51, 0.0
    %v60 = vsel %vm37, %v55, 0.0
    %v61 = vadd.f32 %v59, %v60
    %62 = vadd.xlane.f32.xlu0 %v61
    %v63 = vpop.xlane.xlu0 %62
    %v64 = vsel %vm37, %v52, 0.0
    %v65 = vsel %vm37, %v56, 0.0
    %v66 = vadd.f32 %v64, %v65
    %67 = vadd.xlane.f32.xlu0 %v66
    %v68 = vpop.xlane.xlu0 %67
    %v69 = vsel %vm37, %v63, 0.0
    %v70 = vsel %vm37, %v68, 0.0
    %v71 = vadd.f32 %v69, %v70
    %v72 = vmul.f32 %v50, 0.001953125
    %v73 = vmul.f32 %v71, 0.001953125
    %v74 = vmul.f32 %v72, %v72
    %v75 = vsub.f32 %v73, %v74
    %v76 = vmax.f32 %v75, 0.0
    %v77 = vadd.f32 %v76, 1e-05
    %v78 = vrsqrt.pop %v77
    %v79 = vld [vmem:[%s1] sm:$0xf]
    %v80 = vmul.f32 %v79, %v78
    %v81 = vld [vmem:[%s2] sm:$0xf]
    %v82 = vmul.f32 %v72, %v80
    %v83 = vsub.f32 %v81, %v82
    %85 = vset.pattern.permute.xlu0 0
    %86 = vperm.xlu0 %85, %v80
    %v87 = vpop.permute.xlu0 %86
    %v89 = vunpack.c.l.s4 839922192
    %v90 = vunpack.c.0.s8 %v89
    %v91 = vlaneseq
    %v92 = vshrl.u32 %v91, 7
    %v93 = vsub.s32 %v90, %v92
    %v94 = vrot.slane %v87, %v93
    %v96 = vmul.f32 %v29, %v94
    %v97 = vmul.f32 %v30, %v94
    %99 = vset.pattern.permute.xlu0 0
    %100 = vperm.xlu0 %99, %v83
    %v101 = vpop.permute.xlu0 %100
    %v103 = vunpack.c.l.s4 839922192
    %v104 = vunpack.c.0.s8 %v103
    %v105 = vlaneseq
    %v106 = vshrl.u32 %v105, 7
    %v107 = vsub.s32 %v104, %v106
    %v108 = vrot.slane %v101, %v107
    %v110 = vadd.f32 %v96, %v108
    %v111 = vadd.f32 %v97, %v108
    %112 = vst [vmem:[#allocation5] sm:$0xff] %v110
    %113 = vst [vmem:[#allocation5 + $0x8] sm:$0xff] %v111
    // Predicated region
    $region18: #{tpu_custom_call.1} parent=1 // pred_check
      _
    $region19: #{tpu_custom_call.1} parent=1 // pred_check_branch
      %115 = sbr.rel (0) target = $region21
    $region20: #{tpu_custom_call.1} parent=1 // pred_region
      %s117 = ssub.s32 256, 256
      %118 = vsyncadd [#allocation4], %s117
      %s119 = sshll.u32 [#allocation5], 4
      %s120 = int_to_ptr.vmem [resolvable:$true] %s119
      %125 = dma.vmem_to_hbm [thread:$0]  %s120, 256, %s3, [#allocation4], 128, 128, 8
    $region21: #{tpu_custom_call.1} parent=1 // pred_fallthru
      _
    // Predicated region
    $region22: #{tpu_custom_call.1} parent=1 // pred_check
      _
    $region23: #{tpu_custom_call.1} parent=1 // pred_check_branch
      %127 = sbr.rel (0) target = $region25
    $region24: #{tpu_custom_call.1} parent=1 // pred_region
      %128 = dma.done [#allocation4], 256
    $region25: #{tpu_custom_call.1} parent=1 // pred_fallthru
      _
    %129 = vsyncpa [#allocation3], 1
    %130 = vsyncpa [#allocation4], 1

</llo_original>
